<compile_context>
chip_gen: v7x
topology: tpu7x:2x2x1
jax: 0.10.0
libtpu: 0.0.40
codegen_flags: <defaults>
</compile_context>

<pallas_src>
import jax
import jax.numpy as jnp
from jax.experimental import pallas as pl
from jax.experimental.pallas import tpu as pltpu
import numpy as np


# ---------------------------------------------------------------------------
# Pallas kernel: expert FFNs + weighted accumulation
# ---------------------------------------------------------------------------
def moe_expert_kernel(eid_ref, nact_ref,                    # scalar prefetch (SMEM)
                      x_ref, w_ref, w1_ref, w3_ref, w2_ref,  # inputs (VMEM tiles)
                      o_ref,                                 # output tile
                      acc_ref):                              # f32 VMEM scratch
    t = pl.program_id(0)          # token tile       (parallel)
    h = pl.program_id(1)          # H tile           (arbitrary / reduction)
    e = pl.program_id(2)          # expert slot      (arbitrary / reduction)
    last_h = pl.num_programs(1) - 1
    last_e = pl.num_programs(2) - 1

    @pl.when(jnp.logical_and(h == 0, e == 0))
    def _init():
        acc_ref[...] = jnp.zeros_like(acc_ref)

    # Skip expert slots beyond the number of experts actually selected by any
    # token in this token tile (compute skipped; weight DMA also skipped since
    # padded slots repeat the previous block index).
    @pl.when(e < nact_ref[t])
    def _compute():
        x = x_ref[...]                                                    # (tm, D)
        h1 = jnp.dot(x, w1_ref[...], preferred_element_type=jnp.float32)  # (tm, th)
        h3 = jnp.dot(x, w3_ref[...], preferred_element_type=jnp.float32)  # (tm, th)
        hh = (h1 * jax.lax.logistic(h1)) * h3                             # SwiGLU
        y = jnp.dot(hh.astype(x.dtype), w2_ref[...],
                    preferred_element_type=jnp.float32)                   # (tm, D)
        # w_ref: (tm, 1) routing weight of this expert for these tokens
        # (0 for tokens in the tile that did not select it).
        acc_ref[...] += w_ref[...].astype(jnp.float32) * y

    @pl.when(jnp.logical_and(h == last_h, e == last_e))
    def _finalize():
        o_ref[...] = acc_ref[...].astype(o_ref.dtype)


# ---------------------------------------------------------------------------
# Tile-size helper
# ---------------------------------------------------------------------------
def _choose_tile(dim, target, align):
    """Largest divisor of `dim` <= target, preferring multiples of `align`."""
    if dim <= target:
        return dim
    best = None
    for cand in range(target, 0, -1):
        if dim % cand:
            continue
        if cand % align == 0:
            return cand
        if best is None:
            best = cand
    return best if best is not None else dim


# ---------------------------------------------------------------------------
# Wrapper
# ---------------------------------------------------------------------------
def moe_forward(x, gate_w, w1, w3, w2, num_experts_per_tok,
                token_tile=None, h_tile=None):
    T, D = x.shape
    E = gate_w.shape[1]
    H = w1.shape[2]
    K = num_experts_per_tok

    tm = token_tile if token_tile is not None else _choose_tile(T, 256, 8)
    th = h_tile if h_tile is not None else _choose_tile(H, 512, 128)
    assert T % tm == 0 and H % th == 0
    nt, nh = T // tm, H // th

    # ---- routing: gate matmul + top-k + softmax (tiny glue, plain JAX) ----
    gate_logits = jnp.dot(x, gate_w)                                   # (T, E)
    topk_vals, topk_idx = jax.lax.top_k(gate_logits, K)                # (T, K)
    topk_w = jax.nn.softmax(topk_vals.astype(jnp.float32),
                            axis=-1).astype(x.dtype)
    one_hot = jax.nn.one_hot(topk_idx, E, dtype=topk_w.dtype)          # (T, K, E)
    dense_w = jnp.einsum("tk,tke->te", topk_w, one_hot)                # (T, E)
    dense_w_et1 = dense_w.T[:, :, None]                                # (E, T, 1)

    # ---- per-token-tile compacted expert schedule (for scalar prefetch) ----
    sel = jax.nn.one_hot(topk_idx, E, dtype=jnp.int32).sum(axis=1)     # (T, E) 0/1
    tile_mask = sel.reshape(nt, tm, E).sum(axis=1) > 0                 # (nt, E)
    n_active = tile_mask.sum(axis=1).astype(jnp.int32)                 # (nt,)
    order = jnp.argsort((~tile_mask).astype(jnp.int32),
                        axis=1).astype(jnp.int32)                      # active first
    last_act = order[jnp.arange(nt), jnp.maximum(n_active - 1, 0)]     # (nt,)
    slot = jnp.arange(E, dtype=jnp.int32)[None, :]
    # Padded slots repeat the last active expert id -> no new weight DMA.
    eid = jnp.where(slot < n_active[:, None], order,
                    last_act[:, None]).astype(jnp.int32)               # (nt, E)

    out = pl.pallas_call(
        moe_expert_kernel,
        out_shape=jax.ShapeDtypeStruct((T, D), x.dtype),
        grid_spec=pltpu.PrefetchScalarGridSpec(
            num_scalar_prefetch=2,
            grid=(nt, nh, E),
            in_specs=[
                # x token tile, resident across (h, e)
                pl.BlockSpec((tm, D), lambda t, h, e, eid, na: (t, 0)),
                # dense routing weight column for expert eid[t, e]
                pl.BlockSpec((None, tm, 1),
                             lambda t, h, e, eid, na: (eid[t, e], t, 0)),
                # w1[eid[t, e]][:, h-tile]
                pl.BlockSpec((None, D, th),
                             lambda t, h, e, eid, na: (eid[t, e], 0, h)),
                # w3[eid[t, e]][:, h-tile]
                pl.BlockSpec((None, D, th),
                             lambda t, h, e, eid, na: (eid[t, e], 0, h)),
                # w2[eid[t, e]][h-tile, :]
                pl.BlockSpec((None, th, D),
                             lambda t, h, e, eid, na: (eid[t, e], h, 0)),
            ],
            out_specs=pl.BlockSpec((tm, D), lambda t, h, e, eid, na: (t, 0)),
            scratch_shapes=[pltpu.VMEM((tm, D), jnp.float32)],
        ),
        compiler_params=pltpu.CompilerParams(
            dimension_semantics=("parallel", "arbitrary", "arbitrary"),
            vmem_limit_bytes=48 * 1024 * 1024,
        ),
    )(eid, n_active, x, dense_w_et1, w1, w3, w2)
    return out


# ---------------------------------------------------------------------------
# Pure-JAX reference (mirrors the PyTorch loop)
# ---------------------------------------------------------------------------
def moe_reference(x, gate_w, w1, w3, w2, num_experts_per_tok):
    gl = jnp.dot(x, gate_w)
    vals, sel = jax.lax.top_k(gl, num_experts_per_tok)
    w = jax.nn.softmax(vals.astype(jnp.float32), axis=-1).astype(x.dtype)
    out = jnp.zeros_like(x)
    E = gate_w.shape[1]
    for e in range(E):
        we = jnp.sum(jnp.where(sel == e, w, 0.0), axis=-1, keepdims=True)
        h = jax.nn.silu(x @ w1[e]) * (x @ w3[e])
        out = out + we * (h @ w2[e])
    return out


# ---------------------------------------------------------------------------
if __name__ == "__main__":
    # tokens, model dim, ffn hidden, experts, top-k
    T, D, H, E, K = 16, 128, 256, 8, 2

    key = jax.random.PRNGKey(0)
    kx, kg, k1, k3, k2 = jax.random.split(key, 5)

    x = jax.random.normal(kx, (T, D), dtype=jnp.float32)
    gate_w = jax.random.normal(kg, (D, E), dtype=jnp.float32) * 0.1
    w1 = jax.random.normal(k1, (E, D, H), dtype=jnp.float32) * (1.0 / np.sqrt(D))
    w3 = jax.random.normal(k3, (E, D, H), dtype=jnp.float32) * (1.0 / np.sqrt(D))
    w2 = jax.random.normal(k2, (E, H, D), dtype=jnp.float32) * (1.0 / np.sqrt(H))

    # token_tile=8, h_tile=128 -> grid (2 token tiles, 2 H tiles, 8 experts),
    # exercising the tiled/accumulating/skip paths at small scale.
    out = moe_forward(x, gate_w, w1, w3, w2, K, token_tile=8, h_tile=128)
    jax.block_until_ready(out)

    ref = moe_reference(x, gate_w, w1, w3, w2, K)
    np.testing.assert_allclose(np.asarray(out), np.asarray(ref),
                               rtol=1e-4, atol=1e-4)
    print("KERNEL_OK")
</pallas_src>

<mosaic_0001>
module attributes {stable_mosaic.version = 11 : i64} {
  func.func @moe_expert_kernel(%arg0: i32, %arg1: i32, %arg2: i32, %arg3: memref<2x8xi32, #tpu.memory_space<smem>>, %arg4: memref<2xi32, #tpu.memory_space<smem>>, %arg5: memref<8x128xf32, #tpu.memory_space<vmem>>, %arg6: memref<1x8x1xf32, #tpu.memory_space<vmem>>, %arg7: memref<1x128x128xf32, #tpu.memory_space<vmem>>, %arg8: memref<1x128x128xf32, #tpu.memory_space<vmem>>, %arg9: memref<1x128x128xf32, #tpu.memory_space<vmem>>, %arg10: memref<8x128xf32, #tpu.memory_space<vmem>>, %arg11: memref<8x128xf32, #tpu.memory_space<vmem>>) attributes {dimension_semantics = [#tpu.dimension_semantics<parallel>, #tpu.dimension_semantics<arbitrary>, #tpu.dimension_semantics<arbitrary>], iteration_bounds = array<i64: 2, 2, 8>, scalar_prefetch = 2 : i64, scratch_operands = 1 : i64, tpu.core_type = #tpu.core_type<tc>, window_params = [{transform_indices = @transform_0, window_bounds = array<i64: 8, 128>}, {transform_indices = @transform_1, window_bounds = array<i64: 1, 8, 1>}, {transform_indices = @transform_2, window_bounds = array<i64: 1, 128, 128>}, {transform_indices = @transform_3, window_bounds = array<i64: 1, 128, 128>}, {transform_indices = @transform_4, window_bounds = array<i64: 1, 128, 128>}, {transform_indices = @transform_5, window_bounds = array<i64: 8, 128>}]} {
    %c0_i32 = arith.constant 0 : i32
    %0 = arith.cmpi eq, %arg1, %c0_i32 : i32
    %c0_i32_0 = arith.constant 0 : i32
    %1 = arith.cmpi eq, %arg2, %c0_i32_0 : i32
    %2 = arith.andi %0, %1 : i1
    %3 = arith.extui %2 : i1 to i32
    %c0_i32_1 = arith.constant 0 : i32
    %4 = arith.cmpi ne, %3, %c0_i32_1 : i32
    scf.if %4 {
      %cst = arith.constant 0.000000e+00 : f32
      %15 = vector.broadcast %cst : f32 to vector<8x128xf32>
      %c0 = arith.constant 0 : index
      %c0_4 = arith.constant 0 : index
      %16 = vector.load %arg11[%c0, %c0_4] : memref<8x128xf32, #tpu.memory_space<vmem>>, vector<8x128xf32>
      tpu.vector_store %arg11[%c0, %c0_4], %15 {strides = array<i32>} : memref<8x128xf32, #tpu.memory_space<vmem>>, vector<8x128xf32>,
    } else {
    }
    %5 = arith.index_cast %arg0 : i32 to index
    %6 = memref.load %arg4[%5] : memref<2xi32, #tpu.memory_space<smem>>
    %7 = arith.cmpi slt, %arg2, %6 : i32
    %8 = arith.extui %7 : i1 to i32
    %c0_i32_2 = arith.constant 0 : i32
    %9 = arith.cmpi ne, %8, %c0_i32_2 : i32
    scf.if %9 {
      %c0 = arith.constant 0 : index
      %c0_4 = arith.constant 0 : index
      %15 = vector.load %arg5[%c0, %c0_4] : memref<8x128xf32, #tpu.memory_space<vmem>>, vector<8x128xf32>
      %c0_5 = arith.constant 0 : index
      %c0_6 = arith.constant 0 : index
      %c0_7 = arith.constant 0 : index
      %16 = vector.load %arg7[%c0_5, %c0_6, %c0_7] : memref<1x128x128xf32, #tpu.memory_space<vmem>>, vector<1x128x128xf32>
      %17 = vector.shape_cast %16 : vector<1x128x128xf32> to vector<128x128xf32>
      %cst = arith.constant dense<0.000000e+00> : vector<8x128xf32>
      %18 = tpu.matmul %15, %17, %cst {dimension_numbers = #tpu.dot_dimension_numbers<[1], [0], [0], [1], [0, 0, 1, 1], [], []>} : vector<8x128xf32>, vector<128x128xf32>, vector<8x128xf32> -> vector<8x128xf32>
      %c0_8 = arith.constant 0 : index
      %c0_9 = arith.constant 0 : index
      %c0_10 = arith.constant 0 : index
      %19 = vector.load %arg8[%c0_8, %c0_9, %c0_10] : memref<1x128x128xf32, #tpu.memory_space<vmem>>, vector<1x128x128xf32>
      %20 = vector.shape_cast %19 : vector<1x128x128xf32> to vector<128x128xf32>
      %cst_11 = arith.constant dense<0.000000e+00> : vector<8x128xf32>
      %21 = tpu.matmul %15, %20, %cst_11 {dimension_numbers = #tpu.dot_dimension_numbers<[1], [0], [0], [1], [0, 0, 1, 1], [], []>} : vector<8x128xf32>, vector<128x128xf32>, vector<8x128xf32> -> vector<8x128xf32>
      %22 = arith.negf %18 : vector<8x128xf32>
      %23 = math.exp %22 : vector<8x128xf32>
      %cst_12 = arith.constant 1.000000e+00 : f32
      %24 = vector.broadcast %cst_12 : f32 to vector<8x128xf32>
      %25 = arith.addf %24, %23 : vector<8x128xf32>
      %26 = arith.divf %24, %25 : vector<8x128xf32>
      %27 = arith.mulf %18, %26 : vector<8x128xf32>
      %28 = arith.mulf %27, %21 : vector<8x128xf32>
      %c0_13 = arith.constant 0 : index
      %c0_14 = arith.constant 0 : index
      %c0_15 = arith.constant 0 : index
      %29 = vector.load %arg9[%c0_13, %c0_14, %c0_15] : memref<1x128x128xf32, #tpu.memory_space<vmem>>, vector<1x128x128xf32>
      %30 = vector.shape_cast %29 : vector<1x128x128xf32> to vector<128x128xf32>
      %cst_16 = arith.constant dense<0.000000e+00> : vector<8x128xf32>
      %31 = tpu.matmul %28, %30, %cst_16 {dimension_numbers = #tpu.dot_dimension_numbers<[1], [0], [0], [1], [0, 0, 1, 1], [], []>} : vector<8x128xf32>, vector<128x128xf32>, vector<8x128xf32> -> vector<8x128xf32>
      %c0_17 = arith.constant 0 : index
      %c0_18 = arith.constant 0 : index
      %32 = vector.load %arg11[%c0_17, %c0_18] : memref<8x128xf32, #tpu.memory_space<vmem>>, vector<8x128xf32>
      %c0_19 = arith.constant 0 : index
      %c0_20 = arith.constant 0 : index
      %c0_21 = arith.constant 0 : index
      %33 = vector.load %arg6[%c0_19, %c0_20, %c0_21] : memref<1x8x1xf32, #tpu.memory_space<vmem>>, vector<1x8x1xf32>
      %34 = vector.shape_cast %33 : vector<1x8x1xf32> to vector<8x1xf32>
      %35 = vector.broadcast %34 : vector<8x1xf32> to vector<8x128xf32>
      %36 = arith.mulf %35, %31 : vector<8x128xf32>
      %37 = arith.addf %32, %36 : vector<8x128xf32>
      %c0_22 = arith.constant 0 : index
      %c0_23 = arith.constant 0 : index
      %38 = vector.load %arg11[%c0_22, %c0_23] : memref<8x128xf32, #tpu.memory_space<vmem>>, vector<8x128xf32>
      tpu.vector_store %arg11[%c0_22, %c0_23], %37 {strides = array<i32>} : memref<8x128xf32, #tpu.memory_space<vmem>>, vector<8x128xf32>,
    } else {
    }
    %c1_i32 = arith.constant 1 : i32
    %10 = arith.cmpi eq, %arg1, %c1_i32 : i32
    %c7_i32 = arith.constant 7 : i32
    %11 = arith.cmpi eq, %arg2, %c7_i32 : i32
    %12 = arith.andi %10, %11 : i1
    %13 = arith.extui %12 : i1 to i32
    %c0_i32_3 = arith.constant 0 : i32
    %14 = arith.cmpi ne, %13, %c0_i32_3 : i32
    scf.if %14 {
      %c0 = arith.constant 0 : index
      %c0_4 = arith.constant 0 : index
      %15 = vector.load %arg11[%c0, %c0_4] : memref<8x128xf32, #tpu.memory_space<vmem>>, vector<8x128xf32>
      %c0_5 = arith.constant 0 : index
      %c0_6 = arith.constant 0 : index
      %16 = vector.load %arg10[%c0_5, %c0_6] : memref<8x128xf32, #tpu.memory_space<vmem>>, vector<8x128xf32>
      tpu.vector_store %arg10[%c0_5, %c0_6], %15 {strides = array<i32>} : memref<8x128xf32, #tpu.memory_space<vmem>>, vector<8x128xf32>,
    } else {
    }
    return
  }
  func.func @transform_0(%arg0: i32, %arg1: i32, %arg2: i32, %arg3: memref<2x8xi32, #tpu.memory_space<smem>>, %arg4: memref<2xi32, #tpu.memory_space<smem>>) -> (i32, i32) {
    %c0_i32 = arith.constant 0 : i32
    %c0_i32_0 = arith.constant 0 : i32
    return %arg0, %c0_i32 : i32, i32
  }
  func.func @transform_1(%arg0: i32, %arg1: i32, %arg2: i32, %arg3: memref<2x8xi32, #tpu.memory_space<smem>>, %arg4: memref<2xi32, #tpu.memory_space<smem>>) -> (i32, i32, i32) {
    %0 = arith.index_cast %arg0 : i32 to index
    %1 = arith.index_cast %arg2 : i32 to index
    %2 = memref.load %arg3[%0, %1] : memref<2x8xi32, #tpu.memory_space<smem>>
    %c0_i32 = arith.constant 0 : i32
    %c0_i32_0 = arith.constant 0 : i32
    return %2, %arg0, %c0_i32 : i32, i32, i32
  }
  func.func @transform_2(%arg0: i32, %arg1: i32, %arg2: i32, %arg3: memref<2x8xi32, #tpu.memory_space<smem>>, %arg4: memref<2xi32, #tpu.memory_space<smem>>) -> (i32, i32, i32) {
    %0 = arith.index_cast %arg0 : i32 to index
    %1 = arith.index_cast %arg2 : i32 to index
    %2 = memref.load %arg3[%0, %1] : memref<2x8xi32, #tpu.memory_space<smem>>
    %c0_i32 = arith.constant 0 : i32
    %c0_i32_0 = arith.constant 0 : i32
    return %2, %c0_i32, %arg1 : i32, i32, i32
  }
  func.func @transform_3(%arg0: i32, %arg1: i32, %arg2: i32, %arg3: memref<2x8xi32, #tpu.memory_space<smem>>, %arg4: memref<2xi32, #tpu.memory_space<smem>>) -> (i32, i32, i32) {
    %0 = arith.index_cast %arg0 : i32 to index
    %1 = arith.index_cast %arg2 : i32 to index
    %2 = memref.load %arg3[%0, %1] : memref<2x8xi32, #tpu.memory_space<smem>>
    %c0_i32 = arith.constant 0 : i32
    %c0_i32_0 = arith.constant 0 : i32
    return %2, %c0_i32, %arg1 : i32, i32, i32
  }
  func.func @transform_4(%arg0: i32, %arg1: i32, %arg2: i32, %arg3: memref<2x8xi32, #tpu.memory_space<smem>>, %arg4: memref<2xi32, #tpu.memory_space<smem>>) -> (i32, i32, i32) {
    %0 = arith.index_cast %arg0 : i32 to index
    %1 = arith.index_cast %arg2 : i32 to index
    %2 = memref.load %arg3[%0, %1] : memref<2x8xi32, #tpu.memory_space<smem>>
    %c0_i32 = arith.constant 0 : i32
    %c0_i32_0 = arith.constant 0 : i32
    return %2, %arg1, %c0_i32 : i32, i32, i32
  }
  func.func @transform_5(%arg0: i32, %arg1: i32, %arg2: i32, %arg3: memref<2x8xi32, #tpu.memory_space<smem>>, %arg4: memref<2xi32, #tpu.memory_space<smem>>) -> (i32, i32) {
    %c0_i32 = arith.constant 0 : i32
    %c0_i32_0 = arith.constant 0 : i32
    return %arg0, %c0_i32 : i32, i32
  }
}

</mosaic_0001>

<llo_original>
// kernel: tpu_custom_call.1
$region0: #{tpu_custom_call.1}
  #allocation0 [shape = 'u32[]', space=smem, size = 0x4, offset = 0x4, fixed_abs, tag = 'smem constant byte address 0x4 - core index']
  #allocation1 [shape = 'u32[144,128]{1,0:T(1,128)}', space=vmem, size = 0x12000, scoped, tag = 'internal scratch']
  #allocation2 [shape = 'f32[8,128]{1,0:T(8,128)}', space=vmem, size = 0x1000, scoped, tag = 'scratch operand']
  #allocation3 [shape = 's32[1]{0}', space=sflag, size = 0x4, scoped, tag = 'scoped memory for tpu_custom_call.1']
  #allocation4 [shape = 'u8[1024]{0}', space=smem, size = 0x400, scoped, tag = 'prefetched SMEM operand 0']
  #allocation5 [shape = 'u8[512]{0}', space=smem, size = 0x200, scoped, tag = 'prefetched SMEM operand 1']
  %s0 = inlined_call_operand.vmem [shape: s32[2,8], index: 0, kind: input, shape index: {}]
  %s1 = inlined_call_operand.vmem [shape: s32[2], index: 1, kind: input, shape index: {}]
  %s2 = inlined_call_operand.vmem [shape: f32[16,128], index: 2, kind: input, shape index: {}]
  %s3 = inlined_call_operand.vmem [shape: f32[8,16,1], index: 3, kind: input, shape index: {}]
  %s4 = inlined_call_operand.hbm [shape: f32[8,128,256], index: 4, kind: input, shape index: {}]
  %s5 = inlined_call_operand.hbm [shape: f32[8,128,256], index: 5, kind: input, shape index: {}]
  %s6 = inlined_call_operand.hbm [shape: f32[8,256,128], index: 6, kind: input, shape index: {}]
  %s7 = inlined_call_operand.hbm [shape: f32[16,128], index: 7, kind: output, shape index: {}]
  %s8 = sld [smem:[#allocation0]]
  $region77: #{tpu_custom_call.1} parent=0
    _
  %s10 = ssub.s32 1, %s8
  %s11 = scalar_select 0, %s10, %s8
  %s12 = sshll.u32 %s0, 4
  %s13 = int_to_ptr.vmem [resolvable:$true] %s12
  %15 = dma.vmem_to_smem %s13, 32, [#allocation4], [#allocation3]
  %s16 = sshll.u32 %s1, 4
  %s17 = int_to_ptr.vmem [resolvable:$true] %s16
  %19 = dma.vmem_to_smem %s17, 16, [#allocation5], [#allocation3]
  %20 = dma.done [#allocation3], 48
  %21 = sfence
  $region1: #{tpu_custom_call.1} parent=0
    #allocation6 [shape = 'u8[131072]{0}', space=vmem, size = 0x20000, scoped, tag = 'input window, operand 4']
    #allocation7 [shape = 's32[2]{0}', space=sflag, size = 0x8, scoped, tag = 'scoped memory for tpu_custom_call.1']
    #allocation8 [shape = 's32[2]{0}', space=sflag, size = 0x8, scoped, tag = 'scoped memory for tpu_custom_call.1']
    #allocation9 [shape = 'u8[131072]{0}', space=vmem, size = 0x20000, scoped, tag = 'input window, operand 5']
    #allocation10 [shape = 's32[2]{0}', space=sflag, size = 0x8, scoped, tag = 'scoped memory for tpu_custom_call.1']
    #allocation11 [shape = 'u8[131072]{0}', space=vmem, size = 0x20000, scoped, tag = 'input window, operand 6']
    #allocation12 [shape = 'u8[8192]{0}', space=vmem, size = 0x2000, scoped, tag = 'output window, operand 0']
    %22 = vsyncpa [#allocation7], 0
    %s23 = scalar_lea.sflag [#allocation7], 1
    %24 = vsyncpa %s23, 0
    %25 = vsyncpa [#allocation10], 0
    %s26 = scalar_lea.sflag [#allocation10], 1
    %27 = vsyncpa %s26, 0
    %28 = vsyncpa [#allocation8], 0
    %s29 = scalar_lea.sflag [#allocation8], 1
    %30 = vsyncpa %s29, 0
    loop: start=0, step=1, limit=34
    $region2: #{tpu_custom_call.1} parent=1 // loop_pre_header
      _
    $region3: #{tpu_custom_call.1} parent=1 // loop_header
      %s32 = sphi 0, %s36
      %p33 = scmp.ge.s32.totalorder %s32, 34
      %s39 = sphi 0, %s58
      %s40 = sphi 0, %s54
      %s41 = sphi 0, %s50
      %s42 = sphi 0, %s39
      %s43 = sphi 0, %s40
      %s44 = sphi 0, %s41
      %s45 = sphi 0, %s42
      %s46 = sphi 0, %s43
      %s47 = sphi 0, %s44
      %s61 = sphi 0, %s63
      %s64 = sphi 0, %s61
      %s65 = sphi 0, %s64
      %s81 = sphi 0, %s65
      %s105 = sphi 0, %s107
      %s108 = sphi 0, %s105
      %s109 = sphi 0, %s108
      %s125 = sphi 0, %s109
      %s149 = sphi 0, %s151
      %s152 = sphi 0, %s149
      %s153 = sphi 0, %s152
      %s169 = sphi 0, %s153
      %s193 = sphi 0, %s195
      %s196 = sphi 0, %s193
      %s197 = sphi 0, %s196
      %s213 = sphi 0, %s197
      %s237 = sphi 0, %s239
      %s240 = sphi 0, %s237
      %s241 = sphi 0, %s240
      %s257 = sphi 0, %s241
      %s263 = sphi 0, %s265
      %s266 = sphi 0, %s263
      %s267 = sphi 0, %s266
      %s283 = sphi 0, %s267
    $region4: #{tpu_custom_call.1} parent=1 // loop_header_branch
      %35 = sbr.rel (%p33) target = $region8
    $region5: #{tpu_custom_call.1} parent=1 // loop_body
      %s37 = ssub.s32 %s32, 1
      %s38 = ssub.s32 %s32, 2
      %s48 = sadd.s32 1, %s41
      %p49 = scmp.ge.s32.totalorder %s48, 8
      %s50 = scalar_select %p49, 0, %s48
      %s51 = sadd.s32 1, %s40
      %s52 = scalar_select %p49, %s51, %s40
      %p53 = scmp.ge.s32.totalorder %s52, 2
      %s54 = scalar_select %p53, 0, %s52
      %s55 = sadd.s32 1, %s39
      %s56 = scalar_select %p53, %s55, %s39
      %p57 = scmp.ge.s32.totalorder %s56, 2
      %s58 = scalar_select %p57, 0, %s56
      %s59 = ssub.s32 %s39, %s58
      %p60 = scmp.eq.s32.totalorder %s59, 0
      %s62 = sadd.s32 %s61, 1
      %s63 = scalar_select %p60, %s61, %s62
      %p66 = pneg %p60
      %p67 = scmp.eq.s32.totalorder %s32, 31
      %p68 = por %p66, %p67
      %p69 = scmp.ne.s32.totalorder %s61, %s64
      %p70 = scmp.eq.s32.totalorder %s32, 0
      %p71 = por %p69, %p70
      %p72 = scmp.ne.s32.totalorder %s61, %s64
      %p73 = scmp.eq.s32.totalorder %s37, 31
      %p74 = por %p72, %p73
      %p75 = scmp.ne.s32.totalorder %s64, %s65
      %p76 = scmp.eq.s32.totalorder %s37, 0
      %p77 = por %p75, %p76
      %p78 = scmp.ne.s32.totalorder %s64, %s65
      %p79 = scmp.eq.s32.totalorder %s38, 31
      %p80 = por %p78, %p79
      %p82 = scmp.ne.s32.totalorder %s65, %s81
      %p83 = scmp.eq.s32.totalorder %s38, 0
      %p84 = por %p82, %p83
      %s85 = sshra.s32 %s41, 7
      %s86 = sand.u32 %s41, 127
      %s87 = sadd.s32 %s85, %s39
      %s88 = smul.u32 %s87, 128
      %s89 = sshra.s32 %s41, 7
      %s90 = sand.u32 %s41, 127
      %s91 = sadd.s32 %s88, %s90
      %s92 = sld [smem:[#allocation4 + %s91]]
      %s93 = sshra.s32 %s50, 7
      %s94 = sand.u32 %s50, 127
      %s95 = sadd.s32 %s93, %s58
      %s96 = smul.u32 %s95, 128
      %s97 = sshra.s32 %s50, 7
      %s98 = sand.u32 %s50, 127
      %s99 = sadd.s32 %s96, %s98
      %s100 = sld [smem:[#allocation4 + %s99]]
      %s101 = ssub.s32 %s92, %s100
      %s102 = ssub.s32 %s39, %s58
      %s103 = sor.u32 %s101, %s102
      %p104 = scmp.eq.s32.totalorder %s103, 0
      %s106 = sadd.s32 %s105, 1
      %s107 = scalar_select %p104, %s105, %s106
      %p110 = pneg %p104
      %p111 = scmp.eq.s32.totalorder %s32, 31
      %p112 = por %p110, %p111
      %p113 = scmp.ne.s32.totalorder %s105, %s108
      %p114 = scmp.eq.s32.totalorder %s32, 0
      %p115 = por %p113, %p114
      %p116 = scmp.ne.s32.totalorder %s105, %s108
      %p117 = scmp.eq.s32.totalorder %s37, 31
      %p118 = por %p116, %p117
      %p119 = scmp.ne.s32.totalorder %s108, %s109
      %p120 = scmp.eq.s32.totalorder %s37, 0
      %p121 = por %p119, %p120
      %p122 = scmp.ne.s32.totalorder %s108, %s109
      %p123 = scmp.eq.s32.totalorder %s38, 31
      %p124 = por %p122, %p123
      %p126 = scmp.ne.s32.totalorder %s109, %s125
      %p127 = scmp.eq.s32.totalorder %s38, 0
      %p128 = por %p126, %p127
      %s129 = sshra.s32 %s41, 7
      %s130 = sand.u32 %s41, 127
      %s131 = sadd.s32 %s129, %s39
      %s132 = smul.u32 %s131, 128
      %s133 = sshra.s32 %s41, 7
      %s134 = sand.u32 %s41, 127
      %s135 = sadd.s32 %s132, %s134
      %s136 = sld [smem:[#allocation4 + %s135]]
      %s137 = sshra.s32 %s50, 7
      %s138 = sand.u32 %s50, 127
      %s139 = sadd.s32 %s137, %s58
      %s140 = smul.u32 %s139, 128
      %s141 = sshra.s32 %s50, 7
      %s142 = sand.u32 %s50, 127
      %s143 = sadd.s32 %s140, %s142
      %s144 = sld [smem:[#allocation4 + %s143]]
      %s145 = ssub.s32 %s136, %s144
      %s146 = ssub.s32 %s40, %s54
      %s147 = sor.u32 %s145, %s146
      %p148 = scmp.eq.s32.totalorder %s147, 0
      %s150 = sadd.s32 %s149, 1
      %s151 = scalar_select %p148, %s149, %s150
      %p154 = pneg %p148
      %p155 = scmp.eq.s32.totalorder %s32, 31
      %p156 = por %p154, %p155
      %p157 = scmp.ne.s32.totalorder %s149, %s152
      %p158 = scmp.eq.s32.totalorder %s32, 0
      %p159 = por %p157, %p158
      %p160 = scmp.ne.s32.totalorder %s149, %s152
      %p161 = scmp.eq.s32.totalorder %s37, 31
      %p162 = por %p160, %p161
      %p163 = scmp.ne.s32.totalorder %s152, %s153
      %p164 = scmp.eq.s32.totalorder %s37, 0
      %p165 = por %p163, %p164
      %p166 = scmp.ne.s32.totalorder %s152, %s153
      %p167 = scmp.eq.s32.totalorder %s38, 31
      %p168 = por %p166, %p167
      %p170 = scmp.ne.s32.totalorder %s153, %s169
      %p171 = scmp.eq.s32.totalorder %s38, 0
      %p172 = por %p170, %p171
      %s173 = sshra.s32 %s41, 7
      %s174 = sand.u32 %s41, 127
      %s175 = sadd.s32 %s173, %s39
      %s176 = smul.u32 %s175, 128
      %s177 = sshra.s32 %s41, 7
      %s178 = sand.u32 %s41, 127
      %s179 = sadd.s32 %s176, %s178
      %s180 = sld [smem:[#allocation4 + %s179]]
      %s181 = sshra.s32 %s50, 7
      %s182 = sand.u32 %s50, 127
      %s183 = sadd.s32 %s181, %s58
      %s184 = smul.u32 %s183, 128
      %s185 = sshra.s32 %s50, 7
      %s186 = sand.u32 %s50, 127
      %s187 = sadd.s32 %s184, %s186
      %s188 = sld [smem:[#allocation4 + %s187]]
      %s189 = ssub.s32 %s180, %s188
      %s190 = ssub.s32 %s40, %s54
      %s191 = sor.u32 %s189, %s190
      %p192 = scmp.eq.s32.totalorder %s191, 0
      %s194 = sadd.s32 %s193, 1
      %s195 = scalar_select %p192, %s193, %s194
      %p198 = pneg %p192
      %p199 = scmp.eq.s32.totalorder %s32, 31
      %p200 = por %p198, %p199
      %p201 = scmp.ne.s32.totalorder %s193, %s196
      %p202 = scmp.eq.s32.totalorder %s32, 0
      %p203 = por %p201, %p202
      %p204 = scmp.ne.s32.totalorder %s193, %s196
      %p205 = scmp.eq.s32.totalorder %s37, 31
      %p206 = por %p204, %p205
      %p207 = scmp.ne.s32.totalorder %s196, %s197
      %p208 = scmp.eq.s32.totalorder %s37, 0
      %p209 = por %p207, %p208
      %p210 = scmp.ne.s32.totalorder %s196, %s197
      %p211 = scmp.eq.s32.totalorder %s38, 31
      %p212 = por %p210, %p211
      %p214 = scmp.ne.s32.totalorder %s197, %s213
      %p215 = scmp.eq.s32.totalorder %s38, 0
      %p216 = por %p214, %p215
      %s217 = sshra.s32 %s41, 7
      %s218 = sand.u32 %s41, 127
      %s219 = sadd.s32 %s217, %s39
      %s220 = smul.u32 %s219, 128
      %s221 = sshra.s32 %s41, 7
      %s222 = sand.u32 %s41, 127
      %s223 = sadd.s32 %s220, %s222
      %s224 = sld [smem:[#allocation4 + %s223]]
      %s225 = sshra.s32 %s50, 7
      %s226 = sand.u32 %s50, 127
      %s227 = sadd.s32 %s225, %s58
      %s228 = smul.u32 %s227, 128
      %s229 = sshra.s32 %s50, 7
      %s230 = sand.u32 %s50, 127
      %s231 = sadd.s32 %s228, %s230
      %s232 = sld [smem:[#allocation4 + %s231]]
      %s233 = ssub.s32 %s224, %s232
      %s234 = ssub.s32 %s40, %s54
      %s235 = sor.u32 %s233, %s234
      %p236 = scmp.eq.s32.totalorder %s235, 0
      %s238 = sadd.s32 %s237, 1
      %s239 = scalar_select %p236, %s237, %s238
      %p242 = pneg %p236
      %p243 = scmp.eq.s32.totalorder %s32, 31
      %p244 = por %p242, %p243
      %p245 = scmp.ne.s32.totalorder %s237, %s240
      %p246 = scmp.eq.s32.totalorder %s32, 0
      %p247 = por %p245, %p246
      %p248 = scmp.ne.s32.totalorder %s237, %s240
      %p249 = scmp.eq.s32.totalorder %s37, 31
      %p250 = por %p248, %p249
      %p251 = scmp.ne.s32.totalorder %s240, %s241
      %p252 = scmp.eq.s32.totalorder %s37, 0
      %p253 = por %p251, %p252
      %p254 = scmp.ne.s32.totalorder %s240, %s241
      %p255 = scmp.eq.s32.totalorder %s38, 31
      %p256 = por %p254, %p255
      %p258 = scmp.ne.s32.totalorder %s241, %s257
      %p259 = scmp.eq.s32.totalorder %s38, 0
      %p260 = por %p258, %p259
      %s261 = ssub.s32 %s39, %s58
      %p262 = scmp.eq.s32.totalorder %s261, 0
      %s264 = sadd.s32 %s263, 1
      %s265 = scalar_select %p262, %s263, %s264
      %p268 = pneg %p262
      %p269 = scmp.eq.s32.totalorder %s32, 31
      %p270 = por %p268, %p269
      %p271 = scmp.ne.s32.totalorder %s263, %s266
      %p272 = scmp.eq.s32.totalorder %s32, 0
      %p273 = por %p271, %p272
      %p274 = scmp.ne.s32.totalorder %s263, %s266
      %p275 = scmp.eq.s32.totalorder %s37, 31
      %p276 = por %p274, %p275
      %p277 = scmp.ne.s32.totalorder %s266, %s267
      %p278 = scmp.eq.s32.totalorder %s37, 0
      %p279 = por %p277, %p278
      %p280 = scmp.ne.s32.totalorder %s266, %s267
      %p281 = scmp.eq.s32.totalorder %s38, 31
      %p282 = por %p280, %p281
      %p284 = scmp.ne.s32.totalorder %s267, %s283
      %p285 = scmp.eq.s32.totalorder %s38, 0
      %p286 = por %p284, %p285
      %p287 = scmp.le.s32.totalorder 1, %s32
      %p288 = scmp.lt.s32.totalorder %s32, 33
      %p289 = pnand %p287, %p288
      %p290 = pneg %p289
      // Predicated region
      $region9: #{tpu_custom_call.1} parent=5 // pred_check
        _
      $region10: #{tpu_custom_call.1} parent=5 // pred_check_branch
        %292 = sbr.rel (%p289) target = $region12
      $region11: #{tpu_custom_call.1} parent=5 // pred_region
        %s293 = ssub.s32 %s32, 1
      $region12: #{tpu_custom_call.1} parent=5 // pred_fallthru
        _
      %p294 = scmp.lt.s32.totalorder %s32, 32
      // Predicated region
      $region13: #{tpu_custom_call.1} parent=5 // pred_check
        %p295 = pneg %p294
      $region14: #{tpu_custom_call.1} parent=5 // pred_check_branch
        %297 = sbr.rel (%p295) target = $region16
      $region15: #{tpu_custom_call.1} parent=5 // pred_region
        // Predicated region
        $region17: #{tpu_custom_call.1} parent=15 // pred_check
          %p298 = pneg %p71
        $region18: #{tpu_custom_call.1} parent=15 // pred_check_branch
          %300 = sbr.rel (%p298) target = $region20
        $region19: #{tpu_custom_call.1} parent=15 // pred_region
          %p301 = scmp.lt.s32.totalorder %s39, 1
          %s302 = scalar_select %p301, %s39, 1
          %s303 = smul.addr %s302, 8
          %s304 = scalar_lea.vmem %s2, %s303
        $region20: #{tpu_custom_call.1} parent=15 // pred_fallthru
          _
        // Predicated region
        $region21: #{tpu_custom_call.1} parent=15 // pred_check
          %p305 = pneg %p115
        $region22: #{tpu_custom_call.1} parent=15 // pred_check_branch
          %307 = sbr.rel (%p305) target = $region24
        $region23: #{tpu_custom_call.1} parent=15 // pred_region
          %s308 = sshra.s32 %s41, 7
          %s309 = sand.u32 %s41, 127
          %s310 = sadd.s32 %s308, %s39
          %s311 = smul.u32 %s310, 128
          %s312 = sshra.s32 %s41, 7
          %s313 = sand.u32 %s41, 127
          %s314 = sadd.s32 %s311, %s313
          %s315 = sld [smem:[#allocation4 + %s314]]
          %p316 = scmp.lt.s32.totalorder %s315, 7
          %s317 = scalar_select %p316, %s315, 7
          %p318 = scmp.lt.s32.totalorder %s39, 1
          %s319 = scalar_select %p318, %s39, 1
          %s320 = smul.addr %s317, 2
          %s321 = sadd.s32 %s319, %s320
          %s322 = smul.addr %s321, 8
          %s323 = scalar_lea.vmem %s3, %s322
          %s324 = sshra.s32 %s41, 7
          %s325 = sand.u32 %s41, 127
          %s326 = sadd.s32 %s324, %s39
          %s327 = smul.u32 %s326, 128
          %s328 = sshra.s32 %s41, 7
          %s329 = sand.u32 %s41, 127
          %s330 = sadd.s32 %s327, %s329
          %s331 = sld [smem:[#allocation4 + %s330]]
        $region24: #{tpu_custom_call.1} parent=15 // pred_fallthru
          _
        // Predicated region
        $region25: #{tpu_custom_call.1} parent=15 // pred_check
          %p332 = pneg %p159
        $region26: #{tpu_custom_call.1} parent=15 // pred_check_branch
          %334 = sbr.rel (%p332) target = $region28
        $region27: #{tpu_custom_call.1} parent=15 // pred_region
          %s335 = sand.u32 %s149, 1
          %s336 = scalar_lea.sflag [#allocation7], %s335
          %s337 = sand.u32 %s149, 1
          %s338 = smul.addr %s337, 128
          %s339 = scalar_lea.vmem [#allocation6], %s338
          %s340 = sshra.s32 %s41, 7
          %s341 = sand.u32 %s41, 127
          %s342 = sadd.s32 %s340, %s39
          %s343 = smul.u32 %s342, 128
          %s344 = sshra.s32 %s41, 7
          %s345 = sand.u32 %s41, 127
          %s346 = sadd.s32 %s343, %s345
          %s347 = sld [smem:[#allocation4 + %s346]]
          %s349 = ssub.s32 2048, 2048
          %350 = vsyncadd %s336, %s349
          %s351 = smul.addr %s347, 32
          %s352 = sadd.s32 %s40, %s351
          %s353 = smul.addr %s352, 128
          %s354 = scalar_lea.hbm %s4, %s353
          %s355 = sshll.u32 %s339, 4
          %s356 = int_to_ptr.vmem [resolvable:$true] %s355
          %361 = dma.hbm_to_vmem [thread:$0]  %s354, 2048, %s356, %s336, 256, 128, 8
        $region28: #{tpu_custom_call.1} parent=15 // pred_fallthru
          _
        // Predicated region
        $region29: #{tpu_custom_call.1} parent=15 // pred_check
          %p362 = pneg %p203
        $region30: #{tpu_custom_call.1} parent=15 // pred_check_branch
          %364 = sbr.rel (%p362) target = $region32
        $region31: #{tpu_custom_call.1} parent=15 // pred_region
          %s365 = sand.u32 %s32, 1
          %s366 = scalar_lea.sflag [#allocation10], %s365
          %s367 = sand.u32 %s193, 1
          %s368 = smul.addr %s367, 128
          %s369 = scalar_lea.vmem [#allocation9], %s368
          %s370 = sshra.s32 %s41, 7
          %s371 = sand.u32 %s41, 127
          %s372 = sadd.s32 %s370, %s39
          %s373 = smul.u32 %s372, 128
          %s374 = sshra.s32 %s41, 7
          %s375 = sand.u32 %s41, 127
          %s376 = sadd.s32 %s373, %s375
          %s377 = sld [smem:[#allocation4 + %s376]]
          %s379 = ssub.s32 2048, 2048
          %380 = vsyncadd %s366, %s379
          %s381 = smul.addr %s377, 32
          %s382 = sadd.s32 %s40, %s381
          %s383 = smul.addr %s382, 128
          %s384 = scalar_lea.hbm %s5, %s383
          %s385 = sshll.u32 %s369, 4
          %s386 = int_to_ptr.vmem [resolvable:$true] %s385
          %391 = dma.hbm_to_vmem [thread:$0]  %s384, 2048, %s386, %s366, 256, 128, 8
        $region32: #{tpu_custom_call.1} parent=15 // pred_fallthru
          _
        // Predicated region
        $region33: #{tpu_custom_call.1} parent=15 // pred_check
          %p392 = pneg %p247
        $region34: #{tpu_custom_call.1} parent=15 // pred_check_branch
          %394 = sbr.rel (%p392) target = $region36
        $region35: #{tpu_custom_call.1} parent=15 // pred_region
          %s395 = sand.u32 %s32, 1
          %s396 = scalar_lea.sflag [#allocation10], %s395
          %s397 = sand.u32 %s237, 1
          %s398 = smul.addr %s397, 128
          %s399 = scalar_lea.vmem [#allocation11], %s398
          %s400 = sshra.s32 %s41, 7
          %s401 = sand.u32 %s41, 127
          %s402 = sadd.s32 %s400, %s39
          %s403 = smul.u32 %s402, 128
          %s404 = sshra.s32 %s41, 7
          %s405 = sand.u32 %s41, 127
          %s406 = sadd.s32 %s403, %s405
          %s407 = sld [smem:[#allocation4 + %s406]]
          %s408 = smul.u32 16, %s40
          %s410 = ssub.s32 2048, 2048
          %411 = vsyncadd %s396, %s410
          %s412 = smul.addr %s407, 32
          %s413 = sadd.s32 %s408, %s412
          %s414 = smul.addr %s413, 128
          %s415 = scalar_lea.hbm %s6, %s414
          %s416 = sshll.u32 %s399, 4
          %s417 = int_to_ptr.vmem [resolvable:$true] %s416
          %422 = dma.hbm_to_vmem [thread:$0]  %s415, 2048, %s417, %s396, 128, 128, 8
        $region36: #{tpu_custom_call.1} parent=15 // pred_fallthru
          _
      $region16: #{tpu_custom_call.1} parent=5 // pred_fallthru
        _
      %p423 = scmp.le.s32.totalorder 1, %s32
      %p424 = scmp.lt.s32.totalorder %s32, 33
      %p425 = pnand %p423, %p424
      %p426 = pneg %p425
      // Predicated region
      $region37: #{tpu_custom_call.1} parent=5 // pred_check
        _
      $region38: #{tpu_custom_call.1} parent=5 // pred_check_branch
        %428 = sbr.rel (%p425) target = $region40
      $region39: #{tpu_custom_call.1} parent=5 // pred_region
        %s429 = ssub.s32 %s32, 1
        %s430 = sand.u32 %s152, 1
        %s431 = scalar_lea.sflag [#allocation7], %s430
        %s432 = sand.u32 %s152, 1
        %s433 = smul.addr %s432, 128
        %s434 = scalar_lea.vmem [#allocation6], %s433
        // Predicated region
        $region41: #{tpu_custom_call.1} parent=39 // pred_check
          %p435 = pneg %p165
        $region42: #{tpu_custom_call.1} parent=39 // pred_check_branch
          %437 = sbr.rel (%p435) target = $region44
        $region43: #{tpu_custom_call.1} parent=39 // pred_region
          %438 = dma.done %s431, 2048
        $region44: #{tpu_custom_call.1} parent=39 // pred_fallthru
          _
        %s439 = sand.u32 %s37, 1
        %s440 = scalar_lea.sflag [#allocation10], %s439
        %s441 = sand.u32 %s196, 1
        %s442 = smul.addr %s441, 128
        %s443 = scalar_lea.vmem [#allocation9], %s442
        // Predicated region
        $region45: #{tpu_custom_call.1} parent=39 // pred_check
          %p444 = pneg %p209
        $region46: #{tpu_custom_call.1} parent=39 // pred_check_branch
          %446 = sbr.rel (%p444) target = $region48
        $region47: #{tpu_custom_call.1} parent=39 // pred_region
          %447 = dma.done %s440, 2048
        $region48: #{tpu_custom_call.1} parent=39 // pred_fallthru
          _
        %s448 = sand.u32 %s37, 1
        %s449 = scalar_lea.sflag [#allocation10], %s448
        %s450 = sand.u32 %s240, 1
        %s451 = smul.addr %s450, 128
        %s452 = scalar_lea.vmem [#allocation11], %s451
        // Predicated region
        $region49: #{tpu_custom_call.1} parent=39 // pred_check
          %p453 = pneg %p253
        $region50: #{tpu_custom_call.1} parent=39 // pred_check_branch
          %455 = sbr.rel (%p453) target = $region52
        $region51: #{tpu_custom_call.1} parent=39 // pred_region
          %456 = dma.done %s449, 2048
        $region52: #{tpu_custom_call.1} parent=39 // pred_fallthru
          _
        %p457 = scmp.lt.s32.totalorder %s42, 1
        %s458 = scalar_select %p457, %s42, 1
        %s459 = smul.addr %s458, 8
        %s460 = scalar_lea.vmem %s2, %s459
        %p461 = pneg %p77
        %p462 = pneg %p74
        %s463 = sshra.s32 %s44, 7
        %s464 = sand.u32 %s44, 127
        %s465 = sadd.s32 %s463, %s42
        %s466 = smul.u32 %s465, 128
        %s467 = sshra.s32 %s44, 7
        %s468 = sand.u32 %s44, 127
        %s469 = sadd.s32 %s466, %s468
        %s470 = sld [smem:[#allocation4 + %s469]]
        %p471 = scmp.lt.s32.totalorder %s470, 7
        %s472 = scalar_select %p471, %s470, 7
        %p473 = scmp.lt.s32.totalorder %s42, 1
        %s474 = scalar_select %p473, %s42, 1
        %s475 = smul.addr %s472, 2
        %s476 = sadd.s32 %s474, %s475
        %s477 = smul.addr %s476, 8
        %s478 = scalar_lea.vmem %s3, %s477
        %p479 = pneg %p121
        %p480 = pneg %p118
        %s481 = sand.u32 %s152, 1
        %s482 = scalar_lea.sflag [#allocation7], %s481
        %s483 = sand.u32 %s152, 1
        %s484 = smul.addr %s483, 128
        %s485 = scalar_lea.vmem [#allocation6], %s484
        %p486 = pneg %p165
        %p487 = pneg %p162
        %s488 = sand.u32 %s37, 1
        %s489 = scalar_lea.sflag [#allocation10], %s488
        %s490 = sand.u32 %s196, 1
        %s491 = smul.addr %s490, 128
        %s492 = scalar_lea.vmem [#allocation9], %s491
        %p493 = pneg %p209
        %p494 = pneg %p206
        %s495 = sand.u32 %s37, 1
        %s496 = scalar_lea.sflag [#allocation10], %s495
        %s497 = sand.u32 %s240, 1
        %s498 = smul.addr %s497, 128
        %s499 = scalar_lea.vmem [#allocation11], %s498
        %p500 = pneg %p253
        %p501 = pneg %p250
        %p502 = pneg %p279
        %p503 = pneg %p276
        %s504 = sand.u32 %s266, 1
        %s505 = scalar_lea.sflag [#allocation8], %s504
        %s506 = sand.u32 %s266, 1
        %s507 = smul.addr %s506, 8
        %s508 = scalar_lea.vmem [#allocation12], %s507
        %p509 = scmp.lt.s32.totalorder %s42, 1
        %s510 = scalar_select %p509, %s42, 1
        %s511 = smul.addr %s510, 8
        %s512 = scalar_lea.vmem %s2, %s511
        %s513 = sshra.s32 %s44, 7
        %s514 = sand.u32 %s44, 127
        %s515 = sadd.s32 %s513, %s42
        %s516 = smul.u32 %s515, 128
        %s517 = sshra.s32 %s44, 7
        %s518 = sand.u32 %s44, 127
        %s519 = sadd.s32 %s516, %s518
        %s520 = sld [smem:[#allocation4 + %s519]]
        %p521 = scmp.lt.s32.totalorder %s520, 7
        %s522 = scalar_select %p521, %s520, 7
        %p523 = scmp.lt.s32.totalorder %s42, 1
        %s524 = scalar_select %p523, %s42, 1
        %s525 = smul.addr %s522, 2
        %s526 = sadd.s32 %s524, %s525
        %s527 = smul.addr %s526, 8
        %s528 = scalar_lea.vmem %s3, %s527
        %s529 = sshra.s32 %s44, 7
        %s530 = sand.u32 %s44, 127
        %s531 = sadd.s32 %s529, %s42
        %s532 = smul.u32 %s531, 128
        %s533 = sshra.s32 %s44, 7
        %s534 = sand.u32 %s44, 127
        %s535 = sadd.s32 %s532, %s534
        %s536 = sld [smem:[#allocation4 + %s535]]
        %s537 = sshra.s32 %s44, 7
        %s538 = sand.u32 %s44, 127
        %s539 = sadd.s32 %s537, %s42
        %s540 = smul.u32 %s539, 128
        %s541 = sshra.s32 %s44, 7
        %s542 = sand.u32 %s44, 127
        %s543 = sadd.s32 %s540, %s542
        %s544 = sld [smem:[#allocation4 + %s543]]
        %s545 = sshra.s32 %s44, 7
        %s546 = sand.u32 %s44, 127
        %s547 = sadd.s32 %s545, %s42
        %s548 = smul.u32 %s547, 128
        %s549 = sshra.s32 %s44, 7
        %s550 = sand.u32 %s44, 127
        %s551 = sadd.s32 %s548, %s550
        %s552 = sld [smem:[#allocation4 + %s551]]
        %s553 = sshra.s32 %s44, 7
        %s554 = sand.u32 %s44, 127
        %s555 = sadd.s32 %s553, %s42
        %s556 = smul.u32 %s555, 128
        %s557 = sshra.s32 %s44, 7
        %s558 = sand.u32 %s44, 127
        %s559 = sadd.s32 %s556, %s558
        %s560 = sld [smem:[#allocation4 + %s559]]
        %s561 = smul.u32 16, %s43
        %p562 = scmp.eq.s32.totalorder %s43, 0
        %p563 = scmp.eq.s32.totalorder %s44, 0
        %p564 = pnand %p562, %p563
        %p565 = pneg %p564
        // Predicated region
        $region53: #{tpu_custom_call.1} parent=39 // pred_check
          _
        $region54: #{tpu_custom_call.1} parent=39 // pred_check_branch
          %567 = sbr.rel (%p564) target = $region56
        $region55: #{tpu_custom_call.1} parent=39 // pred_region
          %568 = vst [vmem:[#allocation2] sm:$0xff] 0.0
        $region56: #{tpu_custom_call.1} parent=39 // pred_fallthru
          _
        %s569 = sld [smem:[#allocation5 + %s42]]
        %p570 = scmp.lt.s32.totalorder %s44, %s569
        // Predicated region
        $region57: #{tpu_custom_call.1} parent=39 // pred_check
          %p571 = pneg %p570
        $region58: #{tpu_custom_call.1} parent=39 // pred_check_branch
          %573 = sbr.rel (%p571) target = $region60
        $region59: #{tpu_custom_call.1} parent=39 // pred_region
          %v574 = vld [vmem:[%s512] sm:$0xff]
          %v575 = vld [vmem:[%s434] sm:$0xff]
          %v576 = vld [vmem:[%s434 + $0x8] sm:$0xff]
          %v577 = vld [vmem:[%s434 + $0x10] sm:$0xff]
          %v578 = vld [vmem:[%s434 + $0x18] sm:$0xff]
          %v579 = vld [vmem:[%s434 + $0x20] sm:$0xff]
          %v580 = vld [vmem:[%s434 + $0x28] sm:$0xff]
          %v581 = vld [vmem:[%s434 + $0x30] sm:$0xff]
          %v582 = vld [vmem:[%s434 + $0x38] sm:$0xff]
          %v583 = vld [vmem:[%s434 + $0x40] sm:$0xff]
          %v584 = vld [vmem:[%s434 + $0x48] sm:$0xff]
          %v585 = vld [vmem:[%s434 + $0x50] sm:$0xff]
          %v586 = vld [vmem:[%s434 + $0x58] sm:$0xff]
          %v587 = vld [vmem:[%s434 + $0x60] sm:$0xff]
          %v588 = vld [vmem:[%s434 + $0x68] sm:$0xff]
          %v589 = vld [vmem:[%s434 + $0x70] sm:$0xff]
          %v590 = vld [vmem:[%s434 + $0x78] sm:$0xff]
          %591 = vmatprep.subr.mxu0 0.0
          %592 = vmatpush1.msra.mxu0 %v575
          %593 = vmatprep.subr.mxu0 0.0
          %594 = vmatpush1.msra.mxu0 %v576
          %595 = vmatprep.subr.mxu0 0.0
          %596 = vmatpush1.msra.mxu0 %v577
          %597 = vmatprep.subr.mxu0 0.0
          %598 = vmatpush1.msra.mxu0 %v578
          %599 = vmatprep.subr.mxu0 0.0
          %600 = vmatpush1.msra.mxu0 %v579
          %601 = vmatprep.subr.mxu0 0.0
          %602 = vmatpush1.msra.mxu0 %v580
          %603 = vmatprep.subr.mxu0 0.0
          %604 = vmatpush1.msra.mxu0 %v581
          %605 = vmatprep.subr.mxu0 0.0
          %606 = vmatpush1.msra.mxu0 %v582
          %607 = vmatprep.subr.mxu0 0.0
          %608 = vmatpush1.msra.mxu0 %v583
          %609 = vmatprep.subr.mxu0 0.0
          %610 = vmatpush1.msra.mxu0 %v584
          %611 = vmatprep.subr.mxu0 0.0
          %612 = vmatpush1.msra.mxu0 %v585
          %613 = vmatprep.subr.mxu0 0.0
          %614 = vmatpush1.msra.mxu0 %v586
          %615 = vmatprep.subr.mxu0 0.0
          %616 = vmatpush1.msra.mxu0 %v587
          %617 = vmatprep.subr.mxu0 0.0
          %618 = vmatpush1.msra.mxu0 %v588
          %619 = vmatprep.subr.mxu0 0.0
          %620 = vmatpush1.msra.mxu0 %v589
          %621 = vmatprep.subr.mxu0 0.0
          %622 = vmatpush1.msra.mxu0 %v590
          %623 = vmatprep.subr.mxu0 0.0
          %624 = vmatpush1.msra.mxu0 0.0
          %625 = vmatprep.subr.mxu0 0.0
          %626 = vmatpush1.msra.mxu0 0.0
          %627 = vmatprep.subr.mxu0 0.0
          %628 = vmatpush1.msra.mxu0 0.0
          %629 = vmatprep.subr.mxu0 0.0
          %630 = vmatpush1.msra.mxu0 0.0
          %631 = vmatprep.subr.mxu0 0.0
          %632 = vmatpush1.msra.mxu0 0.0
          %633 = vmatprep.subr.mxu0 0.0
          %634 = vmatpush1.msra.mxu0 0.0
          %635 = vmatprep.subr.mxu0 0.0
          %636 = vmatpush1.msra.mxu0 0.0
          %637 = vmatprep.subr.mxu0 0.0
          %638 = vmatpush1.msra.mxu0 0.0
          %639 = vmatprep.subr.mxu0 0.0
          %640 = vmatpush1.msra.mxu0 0.0
          %641 = vmatprep.subr.mxu0 0.0
          %642 = vmatpush1.msra.mxu0 0.0
          %643 = vmatprep.subr.mxu0 0.0
          %644 = vmatpush1.msra.mxu0 0.0
          %645 = vmatprep.subr.mxu0 0.0
          %646 = vmatpush1.msra.mxu0 0.0
          %647 = vmatprep.subr.mxu0 0.0
          %648 = vmatpush1.msra.mxu0 0.0
          %649 = vmatprep.subr.mxu0 0.0
          %650 = vmatpush1.msra.mxu0 0.0
          %651 = vmatprep.subr.mxu0 0.0
          %652 = vmatpush1.msra.mxu0 0.0
          %653 = vmatprep.subr.mxu0 0.0
          %654 = vmatpush1.msra.mxu0 0.0
          %655 = vmatprep.mubr.f32.mxu0 0.0
          %656 = vmatmul.mubr.f32.gmra.mrb[0].mxu0 %v574
          %v657 = vpop.f32.mrb[0].mxu0
          %v658 = vadd.f32 0.0, %v657
          %v659 = vpop.f32.mrb[0].mxu0
          %660 = vdwg.mxu0
          %v661 = vld [vmem:[%s443] sm:$0xff]
          %v662 = vld [vmem:[%s443 + $0x8] sm:$0xff]
          %v663 = vld [vmem:[%s443 + $0x10] sm:$0xff]
          %v664 = vld [vmem:[%s443 + $0x18] sm:$0xff]
          %v665 = vld [vmem:[%s443 + $0x20] sm:$0xff]
          %v666 = vld [vmem:[%s443 + $0x28] sm:$0xff]
          %v667 = vld [vmem:[%s443 + $0x30] sm:$0xff]
          %v668 = vld [vmem:[%s443 + $0x38] sm:$0xff]
          %v669 = vld [vmem:[%s443 + $0x40] sm:$0xff]
          %v670 = vld [vmem:[%s443 + $0x48] sm:$0xff]
          %v671 = vld [vmem:[%s443 + $0x50] sm:$0xff]
          %v672 = vld [vmem:[%s443 + $0x58] sm:$0xff]
          %v673 = vld [vmem:[%s443 + $0x60] sm:$0xff]
          %v674 = vld [vmem:[%s443 + $0x68] sm:$0xff]
          %v675 = vld [vmem:[%s443 + $0x70] sm:$0xff]
          %v676 = vld [vmem:[%s443 + $0x78] sm:$0xff]
          %677 = vmatprep.subr.mxu0 0.0
          %678 = vmatpush1.msra.mxu0 %v661
          %679 = vmatprep.subr.mxu0 0.0
          %680 = vmatpush1.msra.mxu0 %v662
          %681 = vmatprep.subr.mxu0 0.0
          %682 = vmatpush1.msra.mxu0 %v663
          %683 = vmatprep.subr.mxu0 0.0
          %684 = vmatpush1.msra.mxu0 %v664
          %685 = vmatprep.subr.mxu0 0.0
          %686 = vmatpush1.msra.mxu0 %v665
          %687 = vmatprep.subr.mxu0 0.0
          %688 = vmatpush1.msra.mxu0 %v666
          %689 = vmatprep.subr.mxu0 0.0
          %690 = vmatpush1.msra.mxu0 %v667
          %691 = vmatprep.subr.mxu0 0.0
          %692 = vmatpush1.msra.mxu0 %v668
          %693 = vmatprep.subr.mxu0 0.0
          %694 = vmatpush1.msra.mxu0 %v669
          %695 = vmatprep.subr.mxu0 0.0
          %696 = vmatpush1.msra.mxu0 %v670
          %697 = vmatprep.subr.mxu0 0.0
          %698 = vmatpush1.msra.mxu0 %v671
          %699 = vmatprep.subr.mxu0 0.0
          %700 = vmatpush1.msra.mxu0 %v672
          %701 = vmatprep.subr.mxu0 0.0
          %702 = vmatpush1.msra.mxu0 %v673
          %703 = vmatprep.subr.mxu0 0.0
          %704 = vmatpush1.msra.mxu0 %v674
          %705 = vmatprep.subr.mxu0 0.0
          %706 = vmatpush1.msra.mxu0 %v675
          %707 = vmatprep.subr.mxu0 0.0
          %708 = vmatpush1.msra.mxu0 %v676
          %709 = vmatprep.subr.mxu0 0.0
          %710 = vmatpush1.msra.mxu0 0.0
          %711 = vmatprep.subr.mxu0 0.0
          %712 = vmatpush1.msra.mxu0 0.0
          %713 = vmatprep.subr.mxu0 0.0
          %714 = vmatpush1.msra.mxu0 0.0
          %715 = vmatprep.subr.mxu0 0.0
          %716 = vmatpush1.msra.mxu0 0.0
          %717 = vmatprep.subr.mxu0 0.0
          %718 = vmatpush1.msra.mxu0 0.0
          %719 = vmatprep.subr.mxu0 0.0
          %720 = vmatpush1.msra.mxu0 0.0
          %721 = vmatprep.subr.mxu0 0.0
          %722 = vmatpush1.msra.mxu0 0.0
          %723 = vmatprep.subr.mxu0 0.0
          %724 = vmatpush1.msra.mxu0 0.0
          %725 = vmatprep.subr.mxu0 0.0
          %726 = vmatpush1.msra.mxu0 0.0
          %727 = vmatprep.subr.mxu0 0.0
          %728 = vmatpush1.msra.mxu0 0.0
          %729 = vmatprep.subr.mxu0 0.0
          %730 = vmatpush1.msra.mxu0 0.0
          %731 = vmatprep.subr.mxu0 0.0
          %732 = vmatpush1.msra.mxu0 0.0
          %733 = vmatprep.subr.mxu0 0.0
          %734 = vmatpush1.msra.mxu0 0.0
          %735 = vmatprep.subr.mxu0 0.0
          %736 = vmatpush1.msra.mxu0 0.0
          %737 = vmatprep.subr.mxu0 0.0
          %738 = vmatpush1.msra.mxu0 0.0
          %739 = vmatprep.subr.mxu0 0.0
          %740 = vmatpush1.msra.mxu0 0.0
          %741 = vmatprep.mubr.f32.mxu0 0.0
          %742 = vmatmul.mubr.f32.gmra.mrb[0].mxu0 %v574
          %v743 = vpop.f32.mrb[0].mxu0
          %v744 = vadd.f32 0.0, %v743
          %v745 = vpop.f32.mrb[0].mxu0
          %746 = vdwg.mxu0
          %v747 = vxor.u32 %v658, 2147483648
          %v748 = vmul.f32 %v747, 1.442695
          %v749 = vpow.pop %v748
          %v750 = vadd.f32 %v749, 1.0
          %v751 = vrcp.pop %v750
          %v752 = vmul.f32 1.0, %v751
          %v753 = vmul.f32 %v658, %v752
          %v754 = vmul.f32 %v753, %v744
          %v755 = vld [vmem:[%s452] sm:$0xff]
          %v756 = vld [vmem:[%s452 + $0x8] sm:$0xff]
          %v757 = vld [vmem:[%s452 + $0x10] sm:$0xff]
          %v758 = vld [vmem:[%s452 + $0x18] sm:$0xff]
          %v759 = vld [vmem:[%s452 + $0x20] sm:$0xff]
          %v760 = vld [vmem:[%s452 + $0x28] sm:$0xff]
          %v761 = vld [vmem:[%s452 + $0x30] sm:$0xff]
          %v762 = vld [vmem:[%s452 + $0x38] sm:$0xff]
          %v763 = vld [vmem:[%s452 + $0x40] sm:$0xff]
          %v764 = vld [vmem:[%s452 + $0x48] sm:$0xff]
          %v765 = vld [vmem:[%s452 + $0x50] sm:$0xff]
          %v766 = vld [vmem:[%s452 + $0x58] sm:$0xff]
          %v767 = vld [vmem:[%s452 + $0x60] sm:$0xff]
          %v768 = vld [vmem:[%s452 + $0x68] sm:$0xff]
          %v769 = vld [vmem:[%s452 + $0x70] sm:$0xff]
          %v770 = vld [vmem:[%s452 + $0x78] sm:$0xff]
          %771 = vmatprep.subr.mxu0 0.0
          %772 = vmatpush1.msra.mxu0 %v755
          %773 = vmatprep.subr.mxu0 0.0
          %774 = vmatpush1.msra.mxu0 %v756
          %775 = vmatprep.subr.mxu0 0.0
          %776 = vmatpush1.msra.mxu0 %v757
          %777 = vmatprep.subr.mxu0 0.0
          %778 = vmatpush1.msra.mxu0 %v758
          %779 = vmatprep.subr.mxu0 0.0
          %780 = vmatpush1.msra.mxu0 %v759
          %781 = vmatprep.subr.mxu0 0.0
          %782 = vmatpush1.msra.mxu0 %v760
          %783 = vmatprep.subr.mxu0 0.0
          %784 = vmatpush1.msra.mxu0 %v761
          %785 = vmatprep.subr.mxu0 0.0
          %786 = vmatpush1.msra.mxu0 %v762
          %787 = vmatprep.subr.mxu0 0.0
          %788 = vmatpush1.msra.mxu0 %v763
          %789 = vmatprep.subr.mxu0 0.0
          %790 = vmatpush1.msra.mxu0 %v764
          %791 = vmatprep.subr.mxu0 0.0
          %792 = vmatpush1.msra.mxu0 %v765
          %793 = vmatprep.subr.mxu0 0.0
          %794 = vmatpush1.msra.mxu0 %v766
          %795 = vmatprep.subr.mxu0 0.0
          %796 = vmatpush1.msra.mxu0 %v767
          %797 = vmatprep.subr.mxu0 0.0
          %798 = vmatpush1.msra.mxu0 %v768
          %799 = vmatprep.subr.mxu0 0.0
          %800 = vmatpush1.msra.mxu0 %v769
          %801 = vmatprep.subr.mxu0 0.0
          %802 = vmatpush1.msra.mxu0 %v770
          %803 = vmatprep.subr.mxu0 0.0
          %804 = vmatpush1.msra.mxu0 0.0
          %805 = vmatprep.subr.mxu0 0.0
          %806 = vmatpush1.msra.mxu0 0.0
          %807 = vmatprep.subr.mxu0 0.0
          %808 = vmatpush1.msra.mxu0 0.0
          %809 = vmatprep.subr.mxu0 0.0
          %810 = vmatpush1.msra.mxu0 0.0
          %811 = vmatprep.subr.mxu0 0.0
          %812 = vmatpush1.msra.mxu0 0.0
          %813 = vmatprep.subr.mxu0 0.0
          %814 = vmatpush1.msra.mxu0 0.0
          %815 = vmatprep.subr.mxu0 0.0
          %816 = vmatpush1.msra.mxu0 0.0
          %817 = vmatprep.subr.mxu0 0.0
          %818 = vmatpush1.msra.mxu0 0.0
          %819 = vmatprep.subr.mxu0 0.0
          %820 = vmatpush1.msra.mxu0 0.0
          %821 = vmatprep.subr.mxu0 0.0
          %822 = vmatpush1.msra.mxu0 0.0
          %823 = vmatprep.subr.mxu0 0.0
          %824 = vmatpush1.msra.mxu0 0.0
          %825 = vmatprep.subr.mxu0 0.0
          %826 = vmatpush1.msra.mxu0 0.0
          %827 = vmatprep.subr.mxu0 0.0
          %828 = vmatpush1.msra.mxu0 0.0
          %829 = vmatprep.subr.mxu0 0.0
          %830 = vmatpush1.msra.mxu0 0.0
          %831 = vmatprep.subr.mxu0 0.0
          %832 = vmatpush1.msra.mxu0 0.0
          %833 = vmatprep.subr.mxu0 0.0
          %834 = vmatpush1.msra.mxu0 0.0
          %835 = vmatprep.mubr.f32.mxu0 0.0
          %836 = vmatmul.mubr.f32.gmra.mrb[0].mxu0 %v754
          %v837 = vpop.f32.mrb[0].mxu0
          %v838 = vadd.f32 0.0, %v837
          %v839 = vpop.f32.mrb[0].mxu0
          %840 = vdwg.mxu0
          %v841 = vld [vmem:[#allocation2] sm:$0xff]
          %v842 = vld [vmem:[%s528] sm:$0xff]
          %844 = vset.pattern.permute.xlu0 0
          %845 = vperm.xlu0 %844, %v842
          %v846 = vpop.permute.xlu0 %845
          %v848 = vmul.f32 %v846, %v838
          %v849 = vadd.f32 %v841, %v848
          %850 = vst [vmem:[#allocation2] sm:$0xff] %v849
        $region60: #{tpu_custom_call.1} parent=39 // pred_fallthru
          _
        %p851 = scmp.eq.s32.totalorder %s43, 1
        %p852 = scmp.eq.s32.totalorder %s44, 7
        %p853 = pnand %p851, %p852
        %p854 = pneg %p853
        // Predicated region
        $region61: #{tpu_custom_call.1} parent=39 // pred_check
          _
        $region62: #{tpu_custom_call.1} parent=39 // pred_check_branch
          %856 = sbr.rel (%p853) target = $region64
        $region63: #{tpu_custom_call.1} parent=39 // pred_region
          %v857 = vld [vmem:[#allocation2] sm:$0xff]
          %858 = vst [vmem:[%s508] sm:$0xff] %v857
        $region64: #{tpu_custom_call.1} parent=39 // pred_fallthru
          _
        %s859 = sand.u32 %s266, 1
        %s860 = scalar_lea.sflag [#allocation8], %s859
        %s861 = sand.u32 %s266, 1
        %s862 = smul.addr %s861, 8
        %s863 = scalar_lea.vmem [#allocation12], %s862
        // Predicated region
        $region65: #{tpu_custom_call.1} parent=39 // pred_check
          %p864 = pneg %p276
        $region66: #{tpu_custom_call.1} parent=39 // pred_check_branch
          %866 = sbr.rel (%p864) target = $region68
        $region67: #{tpu_custom_call.1} parent=39 // pred_region
          %s868 = ssub.s32 128, 128
          %869 = vsyncadd %s860, %s868
          %s870 = smul.addr %s42, 128
          %s871 = scalar_lea.hbm %s7, %s870
          %s873 = sshll.u32 %s863, 4
          %s874 = int_to_ptr.vmem [resolvable:$true] %s873
          %876 = dma.vmem_to_hbm [thread:$0]  %s874, 128, %s871, %s860
        $region68: #{tpu_custom_call.1} parent=39 // pred_fallthru
          _
      $region40: #{tpu_custom_call.1} parent=5 // pred_fallthru
        _
      %p877 = scmp.le.s32.totalorder 2, %s32
      // Predicated region
      $region69: #{tpu_custom_call.1} parent=5 // pred_check
        %p878 = pneg %p877
      $region70: #{tpu_custom_call.1} parent=5 // pred_check_branch
        %880 = sbr.rel (%p878) target = $region72
      $region71: #{tpu_custom_call.1} parent=5 // pred_region
        %s881 = ssub.s32 %s32, 2
        // Predicated region
        $region73: #{tpu_custom_call.1} parent=71 // pred_check
          %p882 = pneg %p282
        $region74: #{tpu_custom_call.1} parent=71 // pred_check_branch
          %884 = sbr.rel (%p882) target = $region76
        $region75: #{tpu_custom_call.1} parent=71 // pred_region
          %s885 = sand.u32 %s267, 1
          %s886 = scalar_lea.sflag [#allocation8], %s885
          %s887 = sand.u32 %s267, 1
          %s888 = smul.addr %s887, 8
          %s889 = scalar_lea.vmem [#allocation12], %s888
          %890 = dma.done %s886, 128
        $region76: #{tpu_custom_call.1} parent=71 // pred_fallthru
          _
      $region72: #{tpu_custom_call.1} parent=5 // pred_fallthru
        _
    $region6: #{tpu_custom_call.1} parent=1 // loop_footer
      %s36 = sadd.s32 1, %s32
    $region7: #{tpu_custom_call.1} parent=1 // loop_footer_branch
      %31 = sbr.rel target = $region3
    $region8: #{tpu_custom_call.1} parent=1 // loop_exit
      _
    %891 = vsyncpa [#allocation7], 1
    %s892 = scalar_lea.sflag [#allocation7], 1
    %893 = vsyncpa %s892, 1
    %894 = vsyncpa [#allocation10], 1
    %s895 = scalar_lea.sflag [#allocation10], 1
    %896 = vsyncpa %s895, 1
    %897 = vsyncpa [#allocation8], 1
    %s898 = scalar_lea.sflag [#allocation8], 1
    %899 = vsyncpa %s898, 1

</llo_original>
